<compile_context>
chip_gen: v7x
topology: tpu7x:2x2x1
jax: 0.10.0
libtpu: 0.0.40
codegen_flags: <defaults>
</compile_context>

<pallas_src>
import jax
import jax.numpy as jnp
from jax.experimental import pallas as pl
from jax.experimental.pallas import tpu as pltpu

IN_FEATURES = 10
OUT_FEATURES = 2

# Packed rows (each packed row = R logical rows) per grid step.  Multiple of 32
# so any dtype's sublane granule (8 f32 / 16 bf16 / 32 int8) is satisfied when
# the tile is smaller than the full extent.
DEFAULT_BLOCK_M_PACKED = 1024

# Below this many logical rows, pallas_call launch + grid-step overhead
# dominates the ~100s of FLOPs of work; let XLA fuse the matmul instead.
MIN_PALLAS_ROWS = 8192


def _round_up(x, m):
    return (x + m - 1) // m * m


def _default_pack_factor():
    """R=128 on 256-wide-MXU chips (v6e/v7x), R=64 elsewhere (always valid)."""
    try:
        kind = jax.devices()[0].device_kind.lower()
        if "v6" in kind or "v7" in kind:
            return 128
    except Exception:
        pass
    return 64


def packed_linear_kernel(x_ref, w_ref, b_ref, o_ref):
    # x_ref: (TM, R*10) lane-dense tile; w_ref: (R*10, R*2) block-diagonal
    # weight (grid-invariant -> VMEM resident); b_ref: (1, R*2) tiled bias;
    # o_ref: (TM, R*2) lane-dense output tile.
    acc = jnp.dot(x_ref[...], w_ref[...], preferred_element_type=jnp.float32)
    o_ref[...] = (acc + b_ref[...]).astype(o_ref.dtype)


def linear_pallas(x, weight, bias, *, block_m=DEFAULT_BLOCK_M_PACKED,
                  pack_r=None):
    """Pallas path: x (N, 10), weight (2, 10) [PyTorch layout], bias (2,)."""
    n = x.shape[0]
    r = _default_pack_factor() if pack_r is None else pack_r

    # Pad N to a multiple of R so the lane-dense reshape is exact.
    n_pad = _round_up(n, r)
    if n_pad != n:
        x = jnp.pad(x, ((0, n_pad - n), (0, 0)))
    n_packed = n_pad // r

    # Free (row-major) reshape: each packed row is R consecutive logical rows.
    x_packed = x.reshape(n_packed, r * IN_FEATURES)

    # Block-diagonal weight: kron(I_R, W.T) -> (R*10, R*2).  Built once; its
    # BlockSpec has a constant index map so it is DMA'd to VMEM exactly once.
    wt = jnp.asarray(weight).T.astype(x.dtype)                  # (10, 2)
    w_big = jnp.kron(jnp.eye(r, dtype=x.dtype), wt)             # (R*10, R*2)
    b_big = jnp.tile(jnp.asarray(bias).astype(x.dtype), r).reshape(
        1, r * OUT_FEATURES)                                    # (1, R*2)

    # Tile packed rows; tm is either a multiple of 32 (>= any sublane granule)
    # or the full extent, so the (8,128) block constraint always holds.
    tm = min(block_m, n_packed)
    grid = (pl.cdiv(n_packed, tm),)

    itemsize = jnp.dtype(x.dtype).itemsize
    cost = pl.CostEstimate(
        flops=2 * n * IN_FEATURES * OUT_FEATURES,
        transcendentals=0,
        bytes_accessed=(n * (IN_FEATURES + OUT_FEATURES) * itemsize
                        + w_big.size * itemsize + b_big.size * itemsize),
    )

    out_packed = pl.pallas_call(
        packed_linear_kernel,
        out_shape=jax.ShapeDtypeStruct((n_packed, r * OUT_FEATURES), x.dtype),
        grid_spec=pltpu.PrefetchScalarGridSpec(
            num_scalar_prefetch=0,
            grid=grid,
            in_specs=[
                # x: one lane-dense (TM, R*10) tile per step -> pipelined
                # contiguous HBM streaming.
                pl.BlockSpec((tm, r * IN_FEATURES), lambda i: (i, 0)),
                # weight / bias: constant block index -> fetched once, resident.
                pl.BlockSpec((r * IN_FEATURES, r * OUT_FEATURES),
                             lambda i: (0, 0)),
                pl.BlockSpec((1, r * OUT_FEATURES), lambda i: (0, 0)),
            ],
            out_specs=pl.BlockSpec((tm, r * OUT_FEATURES), lambda i: (i, 0)),
        ),
        compiler_params=pltpu.CompilerParams(
            # No cross-step accumulator -> batch axis is truly parallel; lets
            # Mosaic shard grid steps across v7x's two TensorCores.
            dimension_semantics=("parallel",),
        ),
        cost_estimate=cost,
    )(x_packed, w_big, b_big)

    # Free reshape back to (N_pad, 2), then drop the padding rows.
    out = out_packed.reshape(n_pad, OUT_FEATURES)
    return out[:n] if n_pad != n else out


def simple_model_forward(x, weight, bias, *, block_m=DEFAULT_BLOCK_M_PACKED,
                         pack_r=None, min_pallas_rows=MIN_PALLAS_ROWS):
    """Forward of SimpleModel: y = x @ weight.T + bias.

    Small batches go through plain XLA (fusable, no custom-call overhead);
    large batches use the lane-dense, tiled, pipelined Pallas kernel.
    """
    if x.shape[0] < min_pallas_rows:
        return x @ weight.T + bias
    return linear_pallas(x, weight, bias, block_m=block_m, pack_r=pack_r)


if __name__ == "__main__":
    key = jax.random.PRNGKey(0)
    kx, kw, kb = jax.random.split(key, 3)

    # Small demo shapes.  batch=900 with pack_r=64 pads to 960 rows
    # (15 packed rows); block_m=8 gives a 2-step grid with a partial
    # (7-packed-row) tail tile, exercising tiling + tail masking.
    batch = 900
    x = jax.random.normal(kx, (batch, IN_FEATURES), dtype=jnp.float32)

    # Deterministic parameter init (mimics nn.Linear's uniform(-1/sqrt(in), 1/sqrt(in)))
    bound = 1.0 / (IN_FEATURES ** 0.5)
    weight = jax.random.uniform(
        kw, (OUT_FEATURES, IN_FEATURES), dtype=jnp.float32,
        minval=-bound, maxval=bound)
    bias = jax.random.uniform(
        kb, (OUT_FEATURES,), dtype=jnp.float32, minval=-bound, maxval=bound)

    # Force the Pallas path with a fixed small pack factor / tile so the demo
    # is deterministic across chips (the auto-dispatch would route a batch
    # this small to plain XLA).
    y = linear_pallas(x, weight, bias, block_m=8, pack_r=64)
    jax.block_until_ready(y)

    # Reference check against plain JAX (same math as torch's F.linear).
    y_ref = x @ weight.T + bias
    assert y.shape == (batch, OUT_FEATURES)
    assert jnp.allclose(y, y_ref, atol=1e-5, rtol=1e-5)

    # Also check the default (auto pack factor / full tile) Pallas config.
    y_def = linear_pallas(x, weight, bias)
    jax.block_until_ready(y_def)
    assert jnp.allclose(y_def, y_ref, atol=1e-5, rtol=1e-5)

    # And the auto-dispatch wrapper (XLA path at this size).
    y_auto = simple_model_forward(x, weight, bias)
    jax.block_until_ready(y_auto)
    assert jnp.allclose(y_auto, y_ref, atol=1e-5, rtol=1e-5)

    print("KERNEL_OK")
</pallas_src>

<mosaic_0001>
module attributes {stable_mosaic.version = 11 : i64} {
  func.func @packed_linear_kernel(%arg0: i32, %arg1: memref<8x640xf32, #tpu.memory_space<vmem>>, %arg2: memref<640x128xf32, #tpu.memory_space<vmem>>, %arg3: memref<1x128xf32, #tpu.memory_space<vmem>>, %arg4: memref<8x128xf32, #tpu.memory_space<vmem>>) attributes {dimension_semantics = [#tpu.dimension_semantics<parallel>], iteration_bounds = array<i64: 2>, scalar_prefetch = 0 : i64, scratch_operands = 0 : i64, tpu.core_type = #tpu.core_type<tc>, window_params = [{transform_indices = @transform_0, window_bounds = array<i64: 8, 640>}, {pipeline_mode = #tpu.pipeline_mode<synchronous>, transform_indices = @transform_1, window_bounds = array<i64: 640, 128>}, {pipeline_mode = #tpu.pipeline_mode<synchronous>, transform_indices = @transform_2, window_bounds = array<i64: 1, 128>}, {transform_indices = @transform_3, window_bounds = array<i64: 8, 128>}]} {
    %c0 = arith.constant 0 : index
    %c0_0 = arith.constant 0 : index
    %0 = vector.load %arg1[%c0, %c0_0] : memref<8x640xf32, #tpu.memory_space<vmem>>, vector<8x640xf32>
    %c0_1 = arith.constant 0 : index
    %c0_2 = arith.constant 0 : index
    %1 = vector.load %arg2[%c0_1, %c0_2] : memref<640x128xf32, #tpu.memory_space<vmem>>, vector<640x128xf32>
    %cst = arith.constant dense<0.000000e+00> : vector<8x128xf32>
    %2 = tpu.matmul %0, %1, %cst {dimension_numbers = #tpu.dot_dimension_numbers<[1], [0], [0], [1], [0, 0, 1, 1], [], []>} : vector<8x640xf32>, vector<640x128xf32>, vector<8x128xf32> -> vector<8x128xf32>
    %c0_3 = arith.constant 0 : index
    %c0_4 = arith.constant 0 : index
    %3 = vector.load %arg3[%c0_3, %c0_4] : memref<1x128xf32, #tpu.memory_space<vmem>>, vector<1x128xf32>
    %4 = vector.broadcast %3 : vector<1x128xf32> to vector<8x128xf32>
    %5 = arith.addf %2, %4 : vector<8x128xf32>
    %c0_5 = arith.constant 0 : index
    %c0_6 = arith.constant 0 : index
    %6 = vector.load %arg4[%c0_5, %c0_6] : memref<8x128xf32, #tpu.memory_space<vmem>>, vector<8x128xf32>
    tpu.vector_store %arg4[%c0_5, %c0_6], %5 {strides = array<i32>} : memref<8x128xf32, #tpu.memory_space<vmem>>, vector<8x128xf32>,
    return
  }
  func.func @transform_0(%arg0: i32) -> (i32, i32) {
    %c0_i32 = arith.constant 0 : i32
    %c0_i32_0 = arith.constant 0 : i32
    return %arg0, %c0_i32 : i32, i32
  }
  func.func @transform_1(%arg0: i32) -> (i32, i32) {
    %c0_i32 = arith.constant 0 : i32
    %c0_i32_0 = arith.constant 0 : i32
    %c0_i32_1 = arith.constant 0 : i32
    return %c0_i32, %c0_i32_0 : i32, i32
  }
  func.func @transform_2(%arg0: i32) -> (i32, i32) {
    %c0_i32 = arith.constant 0 : i32
    %c0_i32_0 = arith.constant 0 : i32
    %c0_i32_1 = arith.constant 0 : i32
    return %c0_i32, %c0_i32_0 : i32, i32
  }
  func.func @transform_3(%arg0: i32) -> (i32, i32) {
    %c0_i32 = arith.constant 0 : i32
    %c0_i32_0 = arith.constant 0 : i32
    return %arg0, %c0_i32 : i32, i32
  }
}

</mosaic_0001>

<llo_original>
// kernel: tpu_custom_call.1
$region0: #{tpu_custom_call.1}
  #allocation0 [shape = 'u32[]', space=smem, size = 0x4, offset = 0x4, fixed_abs, tag = 'smem constant byte address 0x4 - core index']
  #allocation1 [shape = 'u32[144,128]{1,0:T(1,128)}', space=vmem, size = 0x12000, scoped, tag = 'internal scratch']
  %s0 = inlined_call_operand.hbm [shape: f32[15,640], index: 0, kind: input, shape index: {}]
  %s1 = inlined_call_operand.hbm [shape: f32[640,128], index: 1, kind: input, shape index: {}]
  %s2 = inlined_call_operand.vmem [shape: f32[1,128], index: 2, kind: input, shape index: {}]
  %s3 = inlined_call_operand.hbm [shape: f32[15,128], index: 3, kind: output, shape index: {}]
  %s4 = sld [smem:[#allocation0]]
  $region53: #{tpu_custom_call.1} parent=0
    _
  %s6 = ssub.s32 1, %s4
  %s7 = scalar_select 0, %s6, %s4
  $region1: #{tpu_custom_call.1} parent=0
    #allocation2 [shape = 'u8[40960]{0}', space=vmem, size = 0xa000, scoped, tag = 'input window, operand 0']
    #allocation3 [shape = 's32[2]{0}', space=sflag, size = 0x8, scoped, tag = 'scoped memory for tpu_custom_call.1']
    #allocation4 [shape = 's32[2]{0}', space=sflag, size = 0x8, scoped, tag = 'scoped memory for tpu_custom_call.1']
    #allocation5 [shape = 'u8[327680]{0}', space=vmem, size = 0x50000, scoped, tag = 'input window, operand 1, single buffered']
    #allocation6 [shape = 's32[1]{0}', space=sflag, size = 0x4, scoped, tag = 'scoped memory for tpu_custom_call.1']
    #allocation7 [shape = 'u8[8192]{0}', space=vmem, size = 0x2000, scoped, tag = 'output window, operand 0']
    %8 = vsyncpa [#allocation3], 0
    %s9 = scalar_lea.sflag [#allocation3], 1
    %10 = vsyncpa %s9, 0
    %11 = vsyncpa [#allocation6], 0
    %12 = vsyncpa [#allocation4], 0
    %s13 = scalar_lea.sflag [#allocation4], 1
    %14 = vsyncpa %s13, 0
    loop: start=0, step=1, limit=4
    $region2: #{tpu_custom_call.1} parent=1 // loop_pre_header
      _
    $region3: #{tpu_custom_call.1} parent=1 // loop_header
      %s16 = sphi 0, %s20
      %p17 = scmp.ge.s32.totalorder %s16, 4
      %s26 = sphi 0, %s28
      %s29 = sphi 0, %s26
      %s30 = sphi 0, %s29
      %s46 = sphi 0, %s30
      %s50 = sphi 0, %s50
      %s52 = sphi 0, %s50
      %s53 = sphi 0, %s52
      %s67 = sphi 0, %s53
      %s71 = sphi 0, %s71
      %s73 = sphi 0, %s71
      %s74 = sphi 0, %s73
      %s88 = sphi 0, %s74
      %s94 = sphi 0, %s96
      %s97 = sphi 0, %s94
      %s98 = sphi 0, %s97
      %s114 = sphi 0, %s98
    $region4: #{tpu_custom_call.1} parent=1 // loop_header_branch
      %19 = sbr.rel (%p17) target = $region8
    $region5: #{tpu_custom_call.1} parent=1 // loop_body
      %s21 = ssub.s32 %s16, 1
      %s22 = ssub.s32 %s16, 2
      %s23 = sadd.s32 %s16, 1
      %s24 = ssub.s32 %s16, %s23
      %p25 = scmp.eq.s32.totalorder %s24, 0
      %s27 = sadd.s32 %s26, 1
      %s28 = scalar_select %p25, %s26, %s27
      %p31 = pneg %p25
      %p32 = scmp.eq.s32.totalorder %s16, 1
      %p33 = por %p31, %p32
      %p34 = scmp.ne.s32.totalorder %s26, %s29
      %p35 = scmp.eq.s32.totalorder %s16, 0
      %p36 = por %p34, %p35
      %p37 = scmp.ne.s32.totalorder %s26, %s29
      %p38 = scmp.eq.s32.totalorder %s21, 1
      %p39 = por %p37, %p38
      %p40 = scmp.ne.s32.totalorder %s29, %s30
      %p41 = scmp.eq.s32.totalorder %s21, 0
      %p42 = por %p40, %p41
      %p43 = scmp.ne.s32.totalorder %s29, %s30
      %p44 = scmp.eq.s32.totalorder %s22, 1
      %p45 = por %p43, %p44
      %p47 = scmp.ne.s32.totalorder %s30, %s46
      %p48 = scmp.eq.s32.totalorder %s22, 0
      %p49 = por %p47, %p48
      %s51 = sadd.s32 %s50, 1
      %p54 = scmp.eq.s32.totalorder %s16, 1
      %p55 = scmp.ne.s32.totalorder %s50, %s52
      %p56 = scmp.eq.s32.totalorder %s16, 0
      %p57 = por %p55, %p56
      %p58 = scmp.ne.s32.totalorder %s50, %s52
      %p59 = scmp.eq.s32.totalorder %s21, 1
      %p60 = por %p58, %p59
      %p61 = scmp.ne.s32.totalorder %s52, %s53
      %p62 = scmp.eq.s32.totalorder %s21, 0
      %p63 = por %p61, %p62
      %p64 = scmp.ne.s32.totalorder %s52, %s53
      %p65 = scmp.eq.s32.totalorder %s22, 1
      %p66 = por %p64, %p65
      %p68 = scmp.ne.s32.totalorder %s53, %s67
      %p69 = scmp.eq.s32.totalorder %s22, 0
      %p70 = por %p68, %p69
      %s72 = sadd.s32 %s71, 1
      %p75 = scmp.eq.s32.totalorder %s16, 1
      %p76 = scmp.ne.s32.totalorder %s71, %s73
      %p77 = scmp.eq.s32.totalorder %s16, 0
      %p78 = por %p76, %p77
      %p79 = scmp.ne.s32.totalorder %s71, %s73
      %p80 = scmp.eq.s32.totalorder %s21, 1
      %p81 = por %p79, %p80
      %p82 = scmp.ne.s32.totalorder %s73, %s74
      %p83 = scmp.eq.s32.totalorder %s21, 0
      %p84 = por %p82, %p83
      %p85 = scmp.ne.s32.totalorder %s73, %s74
      %p86 = scmp.eq.s32.totalorder %s22, 1
      %p87 = por %p85, %p86
      %p89 = scmp.ne.s32.totalorder %s74, %s88
      %p90 = scmp.eq.s32.totalorder %s22, 0
      %p91 = por %p89, %p90
      %s92 = ssub.s32 %s16, %s23
      %p93 = scmp.eq.s32.totalorder %s92, 0
      %s95 = sadd.s32 %s94, 1
      %s96 = scalar_select %p93, %s94, %s95
      %p99 = pneg %p93
      %p100 = scmp.eq.s32.totalorder %s16, 1
      %p101 = por %p99, %p100
      %p102 = scmp.ne.s32.totalorder %s94, %s97
      %p103 = scmp.eq.s32.totalorder %s16, 0
      %p104 = por %p102, %p103
      %p105 = scmp.ne.s32.totalorder %s94, %s97
      %p106 = scmp.eq.s32.totalorder %s21, 1
      %p107 = por %p105, %p106
      %p108 = scmp.ne.s32.totalorder %s97, %s98
      %p109 = scmp.eq.s32.totalorder %s21, 0
      %p110 = por %p108, %p109
      %p111 = scmp.ne.s32.totalorder %s97, %s98
      %p112 = scmp.eq.s32.totalorder %s22, 1
      %p113 = por %p111, %p112
      %p115 = scmp.ne.s32.totalorder %s98, %s114
      %p116 = scmp.eq.s32.totalorder %s22, 0
      %p117 = por %p115, %p116
      %p118 = scmp.le.s32.totalorder 1, %s16
      %p119 = scmp.lt.s32.totalorder %s16, 3
      %p120 = pnand %p118, %p119
      %p121 = pneg %p120
      // Predicated region
      $region9: #{tpu_custom_call.1} parent=5 // pred_check
        _
      $region10: #{tpu_custom_call.1} parent=5 // pred_check_branch
        %123 = sbr.rel (%p120) target = $region12
      $region11: #{tpu_custom_call.1} parent=5 // pred_region
        %s124 = ssub.s32 %s16, 1
        // Predicated region
        $region13: #{tpu_custom_call.1} parent=11 // pred_check
          %p125 = pneg %p63
        $region14: #{tpu_custom_call.1} parent=11 // pred_check_branch
          %127 = sbr.rel (%p125) target = $region16
        $region15: #{tpu_custom_call.1} parent=11 // pred_region
          %s129 = ssub.s32 10240, 10240
          %130 = vsyncadd [#allocation6], %s129
          %s131 = sshll.u32 [#allocation5], 4
          %s132 = int_to_ptr.vmem [resolvable:$true] %s131
          %137 = dma.hbm_to_vmem [thread:$0]  %s1, 10240, %s132, [#allocation6], 128, 128, 8
        $region16: #{tpu_custom_call.1} parent=11 // pred_fallthru
          _
        // Predicated region
        $region17: #{tpu_custom_call.1} parent=11 // pred_check
          %p138 = pneg %p84
        $region18: #{tpu_custom_call.1} parent=11 // pred_check_branch
          %140 = sbr.rel (%p138) target = $region20
        $region19: #{tpu_custom_call.1} parent=11 // pred_region
          _
        $region20: #{tpu_custom_call.1} parent=11 // pred_fallthru
          _
      $region12: #{tpu_custom_call.1} parent=5 // pred_fallthru
        _
      %p141 = scmp.lt.s32.totalorder %s16, 2
      // Predicated region
      $region21: #{tpu_custom_call.1} parent=5 // pred_check
        %p142 = pneg %p141
      $region22: #{tpu_custom_call.1} parent=5 // pred_check_branch
        %144 = sbr.rel (%p142) target = $region24
      $region23: #{tpu_custom_call.1} parent=5 // pred_region
        // Predicated region
        $region25: #{tpu_custom_call.1} parent=23 // pred_check
          %p145 = pneg %p36
        $region26: #{tpu_custom_call.1} parent=23 // pred_check_branch
          %147 = sbr.rel (%p145) target = $region28
        $region27: #{tpu_custom_call.1} parent=23 // pred_region
          %s148 = sand.u32 %s26, 1
          %s149 = scalar_lea.sflag [#allocation3], %s148
          %s150 = sand.u32 %s26, 1
          %s151 = smul.addr %s150, 40
          %s152 = scalar_lea.vmem [#allocation2], %s151
          %s154 = ssub.s32 640, 640
          %155 = vsyncadd %s149, %s154
          %s156 = smul.addr %s16, 5
          %s157 = smul.addr %s156, 128
          %s158 = scalar_lea.hbm %s0, %s157
          %s160 = sshll.u32 %s152, 4
          %s161 = int_to_ptr.vmem [resolvable:$true] %s160
          %163 = dma.hbm_to_vmem [thread:$0]  %s158, 640, %s161, %s149
        $region28: #{tpu_custom_call.1} parent=23 // pred_fallthru
          _
      $region24: #{tpu_custom_call.1} parent=5 // pred_fallthru
        _
      %p164 = scmp.le.s32.totalorder 1, %s16
      %p165 = scmp.lt.s32.totalorder %s16, 3
      %p166 = pnand %p164, %p165
      %p167 = pneg %p166
      // Predicated region
      $region29: #{tpu_custom_call.1} parent=5 // pred_check
        _
      $region30: #{tpu_custom_call.1} parent=5 // pred_check_branch
        %169 = sbr.rel (%p166) target = $region32
      $region31: #{tpu_custom_call.1} parent=5 // pred_region
        %s170 = ssub.s32 %s16, 1
        %s171 = sand.u32 %s29, 1
        %s172 = scalar_lea.sflag [#allocation3], %s171
        %s173 = sand.u32 %s29, 1
        %s174 = smul.addr %s173, 40
        %s175 = scalar_lea.vmem [#allocation2], %s174
        // Predicated region
        $region33: #{tpu_custom_call.1} parent=31 // pred_check
          %p176 = pneg %p42
        $region34: #{tpu_custom_call.1} parent=31 // pred_check_branch
          %178 = sbr.rel (%p176) target = $region36
        $region35: #{tpu_custom_call.1} parent=31 // pred_region
          %179 = dma.done %s172, 640
        $region36: #{tpu_custom_call.1} parent=31 // pred_fallthru
          _
        // Predicated region
        $region37: #{tpu_custom_call.1} parent=31 // pred_check
          %p180 = pneg %p63
        $region38: #{tpu_custom_call.1} parent=31 // pred_check_branch
          %182 = sbr.rel (%p180) target = $region40
        $region39: #{tpu_custom_call.1} parent=31 // pred_region
          %183 = dma.done [#allocation6], 10240
        $region40: #{tpu_custom_call.1} parent=31 // pred_fallthru
          _
        %s184 = sand.u32 %s29, 1
        %s185 = scalar_lea.sflag [#allocation3], %s184
        %s186 = sand.u32 %s29, 1
        %s187 = smul.addr %s186, 40
        %s188 = scalar_lea.vmem [#allocation2], %s187
        %p189 = pneg %p42
        %p190 = pneg %p39
        %p191 = pneg %p63
        %p192 = pneg %p60
        %p193 = pneg %p84
        %p194 = pneg %p81
        %p195 = pneg %p110
        %p196 = pneg %p107
        %s197 = sand.u32 %s97, 1
        %s198 = scalar_lea.sflag [#allocation4], %s197
        %s199 = sand.u32 %s97, 1
        %s200 = smul.addr %s199, 8
        %s201 = scalar_lea.vmem [#allocation7], %s200
        %v202 = vld [vmem:[%s175] sm:$0xff]
        %v203 = vld [vmem:[%s175 + $0x8] sm:$0xff]
        %v204 = vld [vmem:[%s175 + $0x10] sm:$0xff]
        %v205 = vld [vmem:[%s175 + $0x18] sm:$0xff]
        %v206 = vld [vmem:[%s175 + $0x20] sm:$0xff]
        %v207 = vld [vmem:[#allocation5] sm:$0xff]
        %v208 = vld [vmem:[#allocation5 + $0x8] sm:$0xff]
        %v209 = vld [vmem:[#allocation5 + $0x10] sm:$0xff]
        %v210 = vld [vmem:[#allocation5 + $0x18] sm:$0xff]
        %v211 = vld [vmem:[#allocation5 + $0x20] sm:$0xff]
        %v212 = vld [vmem:[#allocation5 + $0x28] sm:$0xff]
        %v213 = vld [vmem:[#allocation5 + $0x30] sm:$0xff]
        %v214 = vld [vmem:[#allocation5 + $0x38] sm:$0xff]
        %v215 = vld [vmem:[#allocation5 + $0x40] sm:$0xff]
        %v216 = vld [vmem:[#allocation5 + $0x48] sm:$0xff]
        %v217 = vld [vmem:[#allocation5 + $0x50] sm:$0xff]
        %v218 = vld [vmem:[#allocation5 + $0x58] sm:$0xff]
        %v219 = vld [vmem:[#allocation5 + $0x60] sm:$0xff]
        %v220 = vld [vmem:[#allocation5 + $0x68] sm:$0xff]
        %v221 = vld [vmem:[#allocation5 + $0x70] sm:$0xff]
        %v222 = vld [vmem:[#allocation5 + $0x78] sm:$0xff]
        %v223 = vld [vmem:[#allocation5 + $0x80] sm:$0xff]
        %v224 = vld [vmem:[#allocation5 + $0x88] sm:$0xff]
        %v225 = vld [vmem:[#allocation5 + $0x90] sm:$0xff]
        %v226 = vld [vmem:[#allocation5 + $0x98] sm:$0xff]
        %v227 = vld [vmem:[#allocation5 + $0xa0] sm:$0xff]
        %v228 = vld [vmem:[#allocation5 + $0xa8] sm:$0xff]
        %v229 = vld [vmem:[#allocation5 + $0xb0] sm:$0xff]
        %v230 = vld [vmem:[#allocation5 + $0xb8] sm:$0xff]
        %v231 = vld [vmem:[#allocation5 + $0xc0] sm:$0xff]
        %v232 = vld [vmem:[#allocation5 + $0xc8] sm:$0xff]
        %v233 = vld [vmem:[#allocation5 + $0xd0] sm:$0xff]
        %v234 = vld [vmem:[#allocation5 + $0xd8] sm:$0xff]
        %v235 = vld [vmem:[#allocation5 + $0xe0] sm:$0xff]
        %v236 = vld [vmem:[#allocation5 + $0xe8] sm:$0xff]
        %v237 = vld [vmem:[#allocation5 + $0xf0] sm:$0xff]
        %v238 = vld [vmem:[#allocation5 + $0xf8] sm:$0xff]
        %v239 = vld [vmem:[#allocation5 + $0x100] sm:$0xff]
        %v240 = vld [vmem:[#allocation5 + $0x108] sm:$0xff]
        %v241 = vld [vmem:[#allocation5 + $0x110] sm:$0xff]
        %v242 = vld [vmem:[#allocation5 + $0x118] sm:$0xff]
        %v243 = vld [vmem:[#allocation5 + $0x120] sm:$0xff]
        %v244 = vld [vmem:[#allocation5 + $0x128] sm:$0xff]
        %v245 = vld [vmem:[#allocation5 + $0x130] sm:$0xff]
        %v246 = vld [vmem:[#allocation5 + $0x138] sm:$0xff]
        %v247 = vld [vmem:[#allocation5 + $0x140] sm:$0xff]
        %v248 = vld [vmem:[#allocation5 + $0x148] sm:$0xff]
        %v249 = vld [vmem:[#allocation5 + $0x150] sm:$0xff]
        %v250 = vld [vmem:[#allocation5 + $0x158] sm:$0xff]
        %v251 = vld [vmem:[#allocation5 + $0x160] sm:$0xff]
        %v252 = vld [vmem:[#allocation5 + $0x168] sm:$0xff]
        %v253 = vld [vmem:[#allocation5 + $0x170] sm:$0xff]
        %v254 = vld [vmem:[#allocation5 + $0x178] sm:$0xff]
        %v255 = vld [vmem:[#allocation5 + $0x180] sm:$0xff]
        %v256 = vld [vmem:[#allocation5 + $0x188] sm:$0xff]
        %v257 = vld [vmem:[#allocation5 + $0x190] sm:$0xff]
        %v258 = vld [vmem:[#allocation5 + $0x198] sm:$0xff]
        %v259 = vld [vmem:[#allocation5 + $0x1a0] sm:$0xff]
        %v260 = vld [vmem:[#allocation5 + $0x1a8] sm:$0xff]
        %v261 = vld [vmem:[#allocation5 + $0x1b0] sm:$0xff]
        %v262 = vld [vmem:[#allocation5 + $0x1b8] sm:$0xff]
        %v263 = vld [vmem:[#allocation5 + $0x1c0] sm:$0xff]
        %v264 = vld [vmem:[#allocation5 + $0x1c8] sm:$0xff]
        %v265 = vld [vmem:[#allocation5 + $0x1d0] sm:$0xff]
        %v266 = vld [vmem:[#allocation5 + $0x1d8] sm:$0xff]
        %v267 = vld [vmem:[#allocation5 + $0x1e0] sm:$0xff]
        %v268 = vld [vmem:[#allocation5 + $0x1e8] sm:$0xff]
        %v269 = vld [vmem:[#allocation5 + $0x1f0] sm:$0xff]
        %v270 = vld [vmem:[#allocation5 + $0x1f8] sm:$0xff]
        %v271 = vld [vmem:[#allocation5 + $0x200] sm:$0xff]
        %v272 = vld [vmem:[#allocation5 + $0x208] sm:$0xff]
        %v273 = vld [vmem:[#allocation5 + $0x210] sm:$0xff]
        %v274 = vld [vmem:[#allocation5 + $0x218] sm:$0xff]
        %v275 = vld [vmem:[#allocation5 + $0x220] sm:$0xff]
        %v276 = vld [vmem:[#allocation5 + $0x228] sm:$0xff]
        %v277 = vld [vmem:[#allocation5 + $0x230] sm:$0xff]
        %v278 = vld [vmem:[#allocation5 + $0x238] sm:$0xff]
        %v279 = vld [vmem:[#allocation5 + $0x240] sm:$0xff]
        %v280 = vld [vmem:[#allocation5 + $0x248] sm:$0xff]
        %v281 = vld [vmem:[#allocation5 + $0x250] sm:$0xff]
        %v282 = vld [vmem:[#allocation5 + $0x258] sm:$0xff]
        %v283 = vld [vmem:[#allocation5 + $0x260] sm:$0xff]
        %v284 = vld [vmem:[#allocation5 + $0x268] sm:$0xff]
        %v285 = vld [vmem:[#allocation5 + $0x270] sm:$0xff]
        %v286 = vld [vmem:[#allocation5 + $0x278] sm:$0xff]
        %v287 = vld [vmem:[%s2] sm:$0x1]
        %v289 = vlaneseq
        %v290 = vshrl.u32 %v289, 7
        %v291 = vsub.s32 0, %v290
        %v292 = vrot.slane %v287, %v291
        %294 = vmatprep.subr.mxu0 0.0
        %295 = vmatpush1.msra.mxu0 %v207
        %296 = vmatprep.subr.mxu0 0.0
        %297 = vmatpush1.msra.mxu0 %v208
        %298 = vmatprep.subr.mxu0 0.0
        %299 = vmatpush1.msra.mxu0 %v209
        %300 = vmatprep.subr.mxu0 0.0
        %301 = vmatpush1.msra.mxu0 %v210
        %302 = vmatprep.subr.mxu0 0.0
        %303 = vmatpush1.msra.mxu0 %v211
        %304 = vmatprep.subr.mxu0 0.0
        %305 = vmatpush1.msra.mxu0 %v212
        %306 = vmatprep.subr.mxu0 0.0
        %307 = vmatpush1.msra.mxu0 %v213
        %308 = vmatprep.subr.mxu0 0.0
        %309 = vmatpush1.msra.mxu0 %v214
        %310 = vmatprep.subr.mxu0 0.0
        %311 = vmatpush1.msra.mxu0 %v215
        %312 = vmatprep.subr.mxu0 0.0
        %313 = vmatpush1.msra.mxu0 %v216
        %314 = vmatprep.subr.mxu0 0.0
        %315 = vmatpush1.msra.mxu0 %v217
        %316 = vmatprep.subr.mxu0 0.0
        %317 = vmatpush1.msra.mxu0 %v218
        %318 = vmatprep.subr.mxu0 0.0
        %319 = vmatpush1.msra.mxu0 %v219
        %320 = vmatprep.subr.mxu0 0.0
        %321 = vmatpush1.msra.mxu0 %v220
        %322 = vmatprep.subr.mxu0 0.0
        %323 = vmatpush1.msra.mxu0 %v221
        %324 = vmatprep.subr.mxu0 0.0
        %325 = vmatpush1.msra.mxu0 %v222
        %326 = vmatprep.subr.mxu0 0.0
        %327 = vmatpush1.msra.mxu0 %v223
        %328 = vmatprep.subr.mxu0 0.0
        %329 = vmatpush1.msra.mxu0 %v224
        %330 = vmatprep.subr.mxu0 0.0
        %331 = vmatpush1.msra.mxu0 %v225
        %332 = vmatprep.subr.mxu0 0.0
        %333 = vmatpush1.msra.mxu0 %v226
        %334 = vmatprep.subr.mxu0 0.0
        %335 = vmatpush1.msra.mxu0 %v227
        %336 = vmatprep.subr.mxu0 0.0
        %337 = vmatpush1.msra.mxu0 %v228
        %338 = vmatprep.subr.mxu0 0.0
        %339 = vmatpush1.msra.mxu0 %v229
        %340 = vmatprep.subr.mxu0 0.0
        %341 = vmatpush1.msra.mxu0 %v230
        %342 = vmatprep.subr.mxu0 0.0
        %343 = vmatpush1.msra.mxu0 %v231
        %344 = vmatprep.subr.mxu0 0.0
        %345 = vmatpush1.msra.mxu0 %v232
        %346 = vmatprep.subr.mxu0 0.0
        %347 = vmatpush1.msra.mxu0 %v233
        %348 = vmatprep.subr.mxu0 0.0
        %349 = vmatpush1.msra.mxu0 %v234
        %350 = vmatprep.subr.mxu0 0.0
        %351 = vmatpush1.msra.mxu0 %v235
        %352 = vmatprep.subr.mxu0 0.0
        %353 = vmatpush1.msra.mxu0 %v236
        %354 = vmatprep.subr.mxu0 0.0
        %355 = vmatpush1.msra.mxu0 %v237
        %356 = vmatprep.subr.mxu0 0.0
        %357 = vmatpush1.msra.mxu0 %v238
        %358 = vmatprep.mubr.f32.mxu0 %v203
        %359 = vmatmul.mubr.f32.gmra.mrb[0].mxu0 %v202
        %v360 = vpop.f32.mrb[0].mxu0
        %v361 = vadd.f32 %v292, %v360
        %v362 = vpop.f32.mrb[0].mxu0
        %363 = vdwg.mxu0
        %364 = vmatprep.subr.mxu0 0.0
        %365 = vmatpush1.msra.mxu0 %v239
        %366 = vmatprep.subr.mxu0 0.0
        %367 = vmatpush1.msra.mxu0 %v240
        %368 = vmatprep.subr.mxu0 0.0
        %369 = vmatpush1.msra.mxu0 %v241
        %370 = vmatprep.subr.mxu0 0.0
        %371 = vmatpush1.msra.mxu0 %v242
        %372 = vmatprep.subr.mxu0 0.0
        %373 = vmatpush1.msra.mxu0 %v243
        %374 = vmatprep.subr.mxu0 0.0
        %375 = vmatpush1.msra.mxu0 %v244
        %376 = vmatprep.subr.mxu0 0.0
        %377 = vmatpush1.msra.mxu0 %v245
        %378 = vmatprep.subr.mxu0 0.0
        %379 = vmatpush1.msra.mxu0 %v246
        %380 = vmatprep.subr.mxu0 0.0
        %381 = vmatpush1.msra.mxu0 %v247
        %382 = vmatprep.subr.mxu0 0.0
        %383 = vmatpush1.msra.mxu0 %v248
        %384 = vmatprep.subr.mxu0 0.0
        %385 = vmatpush1.msra.mxu0 %v249
        %386 = vmatprep.subr.mxu0 0.0
        %387 = vmatpush1.msra.mxu0 %v250
        %388 = vmatprep.subr.mxu0 0.0
        %389 = vmatpush1.msra.mxu0 %v251
        %390 = vmatprep.subr.mxu0 0.0
        %391 = vmatpush1.msra.mxu0 %v252
        %392 = vmatprep.subr.mxu0 0.0
        %393 = vmatpush1.msra.mxu0 %v253
        %394 = vmatprep.subr.mxu0 0.0
        %395 = vmatpush1.msra.mxu0 %v254
        %396 = vmatprep.subr.mxu0 0.0
        %397 = vmatpush1.msra.mxu0 %v255
        %398 = vmatprep.subr.mxu0 0.0
        %399 = vmatpush1.msra.mxu0 %v256
        %400 = vmatprep.subr.mxu0 0.0
        %401 = vmatpush1.msra.mxu0 %v257
        %402 = vmatprep.subr.mxu0 0.0
        %403 = vmatpush1.msra.mxu0 %v258
        %404 = vmatprep.subr.mxu0 0.0
        %405 = vmatpush1.msra.mxu0 %v259
        %406 = vmatprep.subr.mxu0 0.0
        %407 = vmatpush1.msra.mxu0 %v260
        %408 = vmatprep.subr.mxu0 0.0
        %409 = vmatpush1.msra.mxu0 %v261
        %410 = vmatprep.subr.mxu0 0.0
        %411 = vmatpush1.msra.mxu0 %v262
        %412 = vmatprep.subr.mxu0 0.0
        %413 = vmatpush1.msra.mxu0 %v263
        %414 = vmatprep.subr.mxu0 0.0
        %415 = vmatpush1.msra.mxu0 %v264
        %416 = vmatprep.subr.mxu0 0.0
        %417 = vmatpush1.msra.mxu0 %v265
        %418 = vmatprep.subr.mxu0 0.0
        %419 = vmatpush1.msra.mxu0 %v266
        %420 = vmatprep.subr.mxu0 0.0
        %421 = vmatpush1.msra.mxu0 %v267
        %422 = vmatprep.subr.mxu0 0.0
        %423 = vmatpush1.msra.mxu0 %v268
        %424 = vmatprep.subr.mxu0 0.0
        %425 = vmatpush1.msra.mxu0 %v269
        %426 = vmatprep.subr.mxu0 0.0
        %427 = vmatpush1.msra.mxu0 %v270
        %428 = vmatprep.mubr.f32.mxu0 %v205
        %429 = vmatmul.mubr.f32.gmra.mrb[0].mxu0 %v204
        %v430 = vpop.f32.mrb[0].mxu0
        %v431 = vadd.f32 %v361, %v430
        %v432 = vpop.f32.mrb[0].mxu0
        %433 = vdwg.mxu0
        %434 = vmatprep.subr.mxu0 0.0
        %435 = vmatpush1.msra.mxu0 %v271
        %436 = vmatprep.subr.mxu0 0.0
        %437 = vmatpush1.msra.mxu0 %v272
        %438 = vmatprep.subr.mxu0 0.0
        %439 = vmatpush1.msra.mxu0 %v273
        %440 = vmatprep.subr.mxu0 0.0
        %441 = vmatpush1.msra.mxu0 %v274
        %442 = vmatprep.subr.mxu0 0.0
        %443 = vmatpush1.msra.mxu0 %v275
        %444 = vmatprep.subr.mxu0 0.0
        %445 = vmatpush1.msra.mxu0 %v276
        %446 = vmatprep.subr.mxu0 0.0
        %447 = vmatpush1.msra.mxu0 %v277
        %448 = vmatprep.subr.mxu0 0.0
        %449 = vmatpush1.msra.mxu0 %v278
        %450 = vmatprep.subr.mxu0 0.0
        %451 = vmatpush1.msra.mxu0 %v279
        %452 = vmatprep.subr.mxu0 0.0
        %453 = vmatpush1.msra.mxu0 %v280
        %454 = vmatprep.subr.mxu0 0.0
        %455 = vmatpush1.msra.mxu0 %v281
        %456 = vmatprep.subr.mxu0 0.0
        %457 = vmatpush1.msra.mxu0 %v282
        %458 = vmatprep.subr.mxu0 0.0
        %459 = vmatpush1.msra.mxu0 %v283
        %460 = vmatprep.subr.mxu0 0.0
        %461 = vmatpush1.msra.mxu0 %v284
        %462 = vmatprep.subr.mxu0 0.0
        %463 = vmatpush1.msra.mxu0 %v285
        %464 = vmatprep.subr.mxu0 0.0
        %465 = vmatpush1.msra.mxu0 %v286
        %466 = vmatprep.subr.mxu0 0.0
        %467 = vmatpush1.msra.mxu0 0.0
        %468 = vmatprep.subr.mxu0 0.0
        %469 = vmatpush1.msra.mxu0 0.0
        %470 = vmatprep.subr.mxu0 0.0
        %471 = vmatpush1.msra.mxu0 0.0
        %472 = vmatprep.subr.mxu0 0.0
        %473 = vmatpush1.msra.mxu0 0.0
        %474 = vmatprep.subr.mxu0 0.0
        %475 = vmatpush1.msra.mxu0 0.0
        %476 = vmatprep.subr.mxu0 0.0
        %477 = vmatpush1.msra.mxu0 0.0
        %478 = vmatprep.subr.mxu0 0.0
        %479 = vmatpush1.msra.mxu0 0.0
        %480 = vmatprep.subr.mxu0 0.0
        %481 = vmatpush1.msra.mxu0 0.0
        %482 = vmatprep.subr.mxu0 0.0
        %483 = vmatpush1.msra.mxu0 0.0
        %484 = vmatprep.subr.mxu0 0.0
        %485 = vmatpush1.msra.mxu0 0.0
        %486 = vmatprep.subr.mxu0 0.0
        %487 = vmatpush1.msra.mxu0 0.0
        %488 = vmatprep.subr.mxu0 0.0
        %489 = vmatpush1.msra.mxu0 0.0
        %490 = vmatprep.subr.mxu0 0.0
        %491 = vmatpush1.msra.mxu0 0.0
        %492 = vmatprep.subr.mxu0 0.0
        %493 = vmatpush1.msra.mxu0 0.0
        %494 = vmatprep.subr.mxu0 0.0
        %495 = vmatpush1.msra.mxu0 0.0
        %496 = vmatprep.subr.mxu0 0.0
        %497 = vmatpush1.msra.mxu0 0.0
        %498 = vmatprep.mubr.f32.mxu0 0.0
        %499 = vmatmul.mubr.f32.gmra.mrb[0].mxu0 %v206
        %v500 = vpop.f32.mrb[0].mxu0
        %v501 = vadd.f32 %v431, %v500
        %v502 = vpop.f32.mrb[0].mxu0
        %503 = vdwg.mxu0
        %504 = vst [vmem:[%s201] sm:$0xff] %v501
        %s505 = sand.u32 %s97, 1
        %s506 = scalar_lea.sflag [#allocation4], %s505
        %s507 = sand.u32 %s97, 1
        %s508 = smul.addr %s507, 8
        %s509 = scalar_lea.vmem [#allocation7], %s508
        // Predicated region
        $region41: #{tpu_custom_call.1} parent=31 // pred_check
          %p510 = pneg %p107
        $region42: #{tpu_custom_call.1} parent=31 // pred_check_branch
          %512 = sbr.rel (%p510) target = $region44
        $region43: #{tpu_custom_call.1} parent=31 // pred_region
          %s514 = ssub.s32 128, 128
          %515 = vsyncadd %s506, %s514
          %s516 = smul.addr %s21, 128
          %s517 = scalar_lea.hbm %s3, %s516
          %s519 = sshll.u32 %s509, 4
          %s520 = int_to_ptr.vmem [resolvable:$true] %s519
          %522 = dma.vmem_to_hbm [thread:$0]  %s520, 128, %s517, %s506
        $region44: #{tpu_custom_call.1} parent=31 // pred_fallthru
          _
      $region32: #{tpu_custom_call.1} parent=5 // pred_fallthru
        _
      %p523 = scmp.le.s32.totalorder 2, %s16
      // Predicated region
      $region45: #{tpu_custom_call.1} parent=5 // pred_check
        %p524 = pneg %p523
      $region46: #{tpu_custom_call.1} parent=5 // pred_check_branch
        %526 = sbr.rel (%p524) target = $region48
      $region47: #{tpu_custom_call.1} parent=5 // pred_region
        %s527 = ssub.s32 %s16, 2
        // Predicated region
        $region49: #{tpu_custom_call.1} parent=47 // pred_check
          %p528 = pneg %p113
        $region50: #{tpu_custom_call.1} parent=47 // pred_check_branch
          %530 = sbr.rel (%p528) target = $region52
        $region51: #{tpu_custom_call.1} parent=47 // pred_region
          %s531 = sand.u32 %s98, 1
          %s532 = scalar_lea.sflag [#allocation4], %s531
          %s533 = sand.u32 %s98, 1
          %s534 = smul.addr %s533, 8
          %s535 = scalar_lea.vmem [#allocation7], %s534
          %536 = dma.done %s532, 128
        $region52: #{tpu_custom_call.1} parent=47 // pred_fallthru
          _
      $region48: #{tpu_custom_call.1} parent=5 // pred_fallthru
        _
    $region6: #{tpu_custom_call.1} parent=1 // loop_footer
      %s20 = sadd.s32 1, %s16
    $region7: #{tpu_custom_call.1} parent=1 // loop_footer_branch
      %15 = sbr.rel target = $region3
    $region8: #{tpu_custom_call.1} parent=1 // loop_exit
      _
    %537 = vsyncpa [#allocation3], 1
    %s538 = scalar_lea.sflag [#allocation3], 1
    %539 = vsyncpa %s538, 1
    %540 = vsyncpa [#allocation6], 1
    %541 = vsyncpa [#allocation4], 1
    %s542 = scalar_lea.sflag [#allocation4], 1
    %543 = vsyncpa %s542, 1

</llo_original>
